<compile_context>
chip_gen: v7x
topology: tpu7x:2x2x1
jax: 0.10.0
libtpu: 0.0.40
codegen_flags: <defaults>
</compile_context>

<pallas_src>
from functools import partial

import jax
import jax.numpy as jnp
from jax.experimental import pallas as pl
from jax.experimental.pallas import tpu as pltpu


def attention_kernel(enc_ref, dec_ref, we_ref, wd_ref, wf_ref, bias_ref, bf_ref,
                     awe_ref, alpha_ref):
    bb, p, e = enc_ref.shape          # (block_b, P, E)
    d = wd_ref.shape[0]
    a = we_ref.shape[1]

    enc = enc_ref[...]                                          # (Bb, P, E)

    # Encoder branch: one big MXU matmul over all Bb*P pixel rows.
    att1 = jnp.dot(enc.reshape(bb * p, e), we_ref[...],
                   preferred_element_type=jnp.float32)          # (Bb*P, A)

    # Decoder branch: (Bb, D) @ (D, A).
    dec = dec_ref[...].reshape(bb, d)                           # (Bb, D)
    att2 = jnp.dot(dec, wd_ref[...],
                   preferred_element_type=jnp.float32)          # (Bb, A)

    # Fused bias (b_enc + b_dec) added once; ReLU on the VPU.
    h = jnp.maximum(att1.reshape(bb, p, a) + att2[:, None, :] + bias_ref[...],
                    0.0)                                         # (Bb, P, A)

    # Scores over pixels, kept lane-dense as (Bb, P): VPU multiply + lane
    # reduction over A (avoids an N=1 MXU matmul and a (P,1)->(1,P) relayout).
    # The scalar full_att bias is read from SMEM (it cancels in the softmax
    # but is kept for fidelity with the PyTorch module).
    scores = jnp.sum(h * wf_ref[...], axis=2) + bf_ref[0]        # (Bb, P)

    # Per-image softmax over the pixel (lane) axis.
    m = jnp.max(scores, axis=1, keepdims=True)                   # (Bb, 1)
    ex = jnp.exp(scores - m)
    alpha = ex / jnp.sum(ex, axis=1, keepdims=True)              # (Bb, P)
    alpha3 = alpha[:, None, :]                                   # (Bb, 1, P)

    # Attention-weighted encoding: batched (1, P) @ (P, E) on the MXU.
    awe = jnp.einsum('bqp,bpe->bqe', alpha3, enc,
                     preferred_element_type=jnp.float32)         # (Bb, 1, E)

    awe_ref[...] = awe.astype(awe_ref.dtype)
    alpha_ref[...] = alpha3.astype(alpha_ref.dtype)


def _pick_block_b(batch, pixels, target_rows=256):
    """Images per grid step: aim for ~256 matmul rows (128 already fills v5e)."""
    bb = max(1, min(batch, target_rows // max(pixels, 1)))
    while batch % bb:
        bb -= 1
    return bb


@partial(jax.jit, static_argnames=("block_b",))
def attention_forward(encoder_out, decoder_hidden, params, block_b=None):
    B, P, E = encoder_out.shape
    D = decoder_hidden.shape[-1]
    A = params["we"].shape[0]

    # The in-kernel (Bb, P, E) <-> (Bb*P, E) reshapes are tile-aligned only if
    # the pixel count is a sublane multiple.
    # TODO(synk): pad the pixel axis to a multiple of 8 (and mask the softmax)
    # to support arbitrary P.
    assert P % 8 == 0, "num_pixels must be a multiple of 8"

    if block_b is None:
        block_b = _pick_block_b(B, P)
    grid = (B // block_b,)

    # One-time layout plumbing outside the kernel (XLA level, not per grid
    # step): pre-transpose the weights and fuse the two attention biases.
    we_t = params["we"].T                                   # (E, A)
    wd_t = params["wd"].T                                   # (D, A)
    wf_row = params["wf"].reshape(1, A)                     # (1, A)
    bias = (params["be"] + params["bd"]).reshape(1, A)      # (1, A)
    bf = params["bf"].reshape(1)                            # (1,)  -> SMEM
    dec3 = decoder_hidden.reshape(B, 1, D)

    # NOTE: the constant-index weight blocks are small here; at production
    # sizes (E, A, D ~ 512-2048) mark them single-buffered
    # (pipeline_mode=pl.Buffered(1)) to free VMEM for larger encoder row tiles.
    awe, alpha = pl.pallas_call(
        attention_kernel,
        out_shape=(jax.ShapeDtypeStruct((B, 1, E), jnp.float32),
                   jax.ShapeDtypeStruct((B, 1, P), jnp.float32)),
        grid_spec=pltpu.PrefetchScalarGridSpec(
            num_scalar_prefetch=0,
            grid=grid,
            in_specs=[
                pl.BlockSpec((block_b, P, E), lambda b: (b, 0, 0)),   # encoder_out
                pl.BlockSpec((block_b, 1, D), lambda b: (b, 0, 0)),   # decoder_hidden
                pl.BlockSpec((E, A), lambda b: (0, 0)),               # W_enc^T
                pl.BlockSpec((D, A), lambda b: (0, 0)),               # W_dec^T
                pl.BlockSpec((1, A), lambda b: (0, 0)),               # W_full (row)
                pl.BlockSpec((1, A), lambda b: (0, 0)),               # b_enc + b_dec
                pl.BlockSpec(memory_space=pltpu.MemorySpace.SMEM),    # b_full scalar
            ],
            out_specs=[
                pl.BlockSpec((block_b, 1, E), lambda b: (b, 0, 0)),   # awe
                pl.BlockSpec((block_b, 1, P), lambda b: (b, 0, 0)),   # alpha (lane-dense)
            ],
        ),
        compiler_params=pltpu.CompilerParams(
            dimension_semantics=("parallel",),      # batch axis shards across TCs (v7x)
            vmem_limit_bytes=48 * 1024 * 1024,      # headroom under v7x's 64 MiB VMEM
        ),
    )(encoder_out, dec3, we_t, wd_t, wf_row, bias, bf)

    return awe.reshape(B, E), alpha.reshape(B, P)


def attention_ref(enc, dec, p):
    att1 = enc @ p["we"].T + p["be"]
    att2 = dec @ p["wd"].T + p["bd"]
    h = jax.nn.relu(att1 + att2[:, None, :])
    att = (h @ p["wf"].T + p["bf"])[..., 0]
    alpha = jax.nn.softmax(att, axis=1)
    awe = (enc * alpha[..., None]).sum(axis=1)
    return awe, alpha


if __name__ == "__main__":
    B, P, E, D, A = 2, 16, 32, 32, 32

    key = jax.random.PRNGKey(0)
    ks = jax.random.split(key, 8)
    encoder_out = jax.random.normal(ks[0], (B, P, E), jnp.float32)
    decoder_hidden = jax.random.normal(ks[1], (B, D), jnp.float32)

    params = {
        "we": 0.1 * jax.random.normal(ks[2], (A, E), jnp.float32),
        "be": 0.1 * jax.random.normal(ks[3], (A,), jnp.float32),
        "wd": 0.1 * jax.random.normal(ks[4], (A, D), jnp.float32),
        "bd": 0.1 * jax.random.normal(ks[5], (A,), jnp.float32),
        "wf": 0.1 * jax.random.normal(ks[6], (1, A), jnp.float32),
        "bf": 0.1 * jax.random.normal(ks[7], (1,), jnp.float32),
    }

    awe, alpha = attention_forward(encoder_out, decoder_hidden, params)
    jax.block_until_ready((awe, alpha))

    awe_r, alpha_r = attention_ref(encoder_out, decoder_hidden, params)

    # Precision-independent structural check: softmax rows sum to one.
    assert jnp.allclose(jnp.sum(alpha, axis=1), 1.0, atol=1e-5)
    # Tolerances leave room for the different f32-matmul pass decompositions
    # the MXU may use inside the Pallas kernel vs. the XLA reference; typical
    # agreement is ~1e-6.
    assert jnp.allclose(alpha, alpha_r, atol=1e-3, rtol=1e-3)
    assert jnp.allclose(awe, awe_r, atol=1e-2, rtol=1e-3)

    print("KERNEL_OK")
</pallas_src>

<mosaic_0001>
module attributes {stable_mosaic.version = 11 : i64} {
  func.func @attention_kernel(%arg0: i32, %arg1: memref<2x16x32xf32, #tpu.memory_space<vmem>>, %arg2: memref<2x1x32xf32, #tpu.memory_space<vmem>>, %arg3: memref<32x32xf32, #tpu.memory_space<vmem>>, %arg4: memref<32x32xf32, #tpu.memory_space<vmem>>, %arg5: memref<1x32xf32, #tpu.memory_space<vmem>>, %arg6: memref<1x32xf32, #tpu.memory_space<vmem>>, %arg7: memref<1xf32, #tpu.memory_space<smem>>, %arg8: memref<2x1x32xf32, #tpu.memory_space<vmem>>, %arg9: memref<2x1x16xf32, #tpu.memory_space<vmem>>) attributes {dimension_semantics = [#tpu.dimension_semantics<parallel>], iteration_bounds = array<i64: 1>, scalar_prefetch = 0 : i64, scratch_operands = 0 : i64, tpu.core_type = #tpu.core_type<tc>, window_params = [{transform_indices = @transform_0, window_bounds = array<i64: 2, 16, 32>}, {transform_indices = @transform_1, window_bounds = array<i64: 2, 1, 32>}, {pipeline_mode = #tpu.pipeline_mode<synchronous>, transform_indices = @transform_2, window_bounds = array<i64: 32, 32>}, {pipeline_mode = #tpu.pipeline_mode<synchronous>, transform_indices = @transform_3, window_bounds = array<i64: 32, 32>}, {pipeline_mode = #tpu.pipeline_mode<synchronous>, transform_indices = @transform_4, window_bounds = array<i64: 1, 32>}, {pipeline_mode = #tpu.pipeline_mode<synchronous>, transform_indices = @transform_5, window_bounds = array<i64: 1, 32>}, {transform_indices = @transform_6, window_bounds = array<i64: 1>}, {transform_indices = @transform_7, window_bounds = array<i64: 2, 1, 32>}, {transform_indices = @transform_8, window_bounds = array<i64: 2, 1, 16>}]} {
    %c0 = arith.constant 0 : index
    %c0_0 = arith.constant 0 : index
    %c0_1 = arith.constant 0 : index
    %0 = vector.load %arg1[%c0, %c0_0, %c0_1] : memref<2x16x32xf32, #tpu.memory_space<vmem>>, vector<2x16x32xf32>
    %1 = vector.shape_cast %0 : vector<2x16x32xf32> to vector<32x32xf32>
    %c0_2 = arith.constant 0 : index
    %c0_3 = arith.constant 0 : index
    %2 = vector.load %arg3[%c0_2, %c0_3] : memref<32x32xf32, #tpu.memory_space<vmem>>, vector<32x32xf32>
    %cst = arith.constant dense<0.000000e+00> : vector<32x32xf32>
    %3 = tpu.matmul %1, %2, %cst {dimension_numbers = #tpu.dot_dimension_numbers<[1], [0], [0], [1], [0, 0, 1, 1], [], []>} : vector<32x32xf32>, vector<32x32xf32>, vector<32x32xf32> -> vector<32x32xf32>
    %c0_4 = arith.constant 0 : index
    %c0_5 = arith.constant 0 : index
    %c0_6 = arith.constant 0 : index
    %4 = vector.load %arg2[%c0_4, %c0_5, %c0_6] : memref<2x1x32xf32, #tpu.memory_space<vmem>>, vector<2x1x32xf32>
    %5 = vector.shape_cast %4 : vector<2x1x32xf32> to vector<2x32xf32>
    %c0_7 = arith.constant 0 : index
    %c0_8 = arith.constant 0 : index
    %6 = vector.load %arg4[%c0_7, %c0_8] : memref<32x32xf32, #tpu.memory_space<vmem>>, vector<32x32xf32>
    %cst_9 = arith.constant dense<0.000000e+00> : vector<2x32xf32>
    %7 = tpu.matmul %5, %6, %cst_9 {dimension_numbers = #tpu.dot_dimension_numbers<[1], [0], [0], [1], [0, 0, 1, 1], [], []>} : vector<2x32xf32>, vector<32x32xf32>, vector<2x32xf32> -> vector<2x32xf32>
    %8 = vector.shape_cast %3 : vector<32x32xf32> to vector<2x16x32xf32>
    %9 = vector.shape_cast %7 : vector<2x32xf32> to vector<2x1x32xf32>
    %10 = vector.broadcast %9 : vector<2x1x32xf32> to vector<2x16x32xf32>
    %11 = arith.addf %8, %10 : vector<2x16x32xf32>
    %c0_10 = arith.constant 0 : index
    %c0_11 = arith.constant 0 : index
    %12 = vector.load %arg6[%c0_10, %c0_11] : memref<1x32xf32, #tpu.memory_space<vmem>>, vector<1x32xf32>
    %13 = vector.shape_cast %12 : vector<1x32xf32> to vector<1x1x32xf32>
    %14 = vector.broadcast %13 : vector<1x1x32xf32> to vector<2x16x32xf32>
    %15 = arith.addf %11, %14 : vector<2x16x32xf32>
    %cst_12 = arith.constant 0.000000e+00 : f32
    %16 = vector.broadcast %cst_12 : f32 to vector<2x16x32xf32>
    %17 = arith.maximumf %15, %16 : vector<2x16x32xf32>
    %c0_13 = arith.constant 0 : index
    %c0_14 = arith.constant 0 : index
    %18 = vector.load %arg5[%c0_13, %c0_14] : memref<1x32xf32, #tpu.memory_space<vmem>>, vector<1x32xf32>
    %19 = vector.shape_cast %18 : vector<1x32xf32> to vector<1x1x32xf32>
    %20 = vector.broadcast %19 : vector<1x1x32xf32> to vector<2x16x32xf32>
    %21 = arith.mulf %17, %20 : vector<2x16x32xf32>
    %cst_15 = arith.constant dense<0.000000e+00> : vector<2x16xf32>
    %22 = vector.multi_reduction <add>, %21, %cst_15 [2] : vector<2x16x32xf32> to vector<2x16xf32>
    %c0_16 = arith.constant 0 : index
    %23 = memref.load %arg7[%c0_16] : memref<1xf32, #tpu.memory_space<smem>>
    %24 = vector.broadcast %23 : f32 to vector<2x16xf32>
    %25 = arith.addf %22, %24 : vector<2x16xf32>
    %cst_17 = arith.constant dense<0xFF800000> : vector<2xf32>
    %26 = vector.multi_reduction <maximumf>, %25, %cst_17 [1] : vector<2x16xf32> to vector<2xf32>
    %27 = vector.shape_cast %26 : vector<2xf32> to vector<2x1xf32>
    %28 = vector.broadcast %27 : vector<2x1xf32> to vector<2x16xf32>
    %29 = arith.subf %25, %28 : vector<2x16xf32>
    %30 = math.exp %29 : vector<2x16xf32>
    %cst_18 = arith.constant dense<0.000000e+00> : vector<2xf32>
    %31 = vector.multi_reduction <add>, %30, %cst_18 [1] : vector<2x16xf32> to vector<2xf32>
    %32 = vector.shape_cast %31 : vector<2xf32> to vector<2x1xf32>
    %33 = vector.broadcast %32 : vector<2x1xf32> to vector<2x16xf32>
    %34 = arith.divf %30, %33 : vector<2x16xf32>
    %35 = vector.shape_cast %34 : vector<2x16xf32> to vector<2x1x16xf32>
    "tpu.trace_start"() <{level = 10 : i32, message = "bqp,bpe->bqe"}> : () -> ()
    %cst_19 = arith.constant dense<0.000000e+00> : vector<2x1x32xf32>
    %36 = tpu.matmul %35, %0, %cst_19 {dimension_numbers = #tpu.dot_dimension_numbers<[2], [1], [1], [2], [0, 0, 0, 1, 1, 2], [0], [0]>} : vector<2x1x16xf32>, vector<2x16x32xf32>, vector<2x1x32xf32> -> vector<2x1x32xf32>
    "tpu.trace_stop"() : () -> ()
    %c0_20 = arith.constant 0 : index
    %c0_21 = arith.constant 0 : index
    %c0_22 = arith.constant 0 : index
    %37 = vector.load %arg8[%c0_20, %c0_21, %c0_22] : memref<2x1x32xf32, #tpu.memory_space<vmem>>, vector<2x1x32xf32>
    tpu.vector_store %arg8[%c0_20, %c0_21, %c0_22], %36 {strides = array<i32>} : memref<2x1x32xf32, #tpu.memory_space<vmem>>, vector<2x1x32xf32>,
    %c0_23 = arith.constant 0 : index
    %c0_24 = arith.constant 0 : index
    %c0_25 = arith.constant 0 : index
    %38 = vector.load %arg9[%c0_23, %c0_24, %c0_25] : memref<2x1x16xf32, #tpu.memory_space<vmem>>, vector<2x1x16xf32>
    tpu.vector_store %arg9[%c0_23, %c0_24, %c0_25], %35 {strides = array<i32>} : memref<2x1x16xf32, #tpu.memory_space<vmem>>, vector<2x1x16xf32>,
    return
  }
  func.func @transform_0(%arg0: i32) -> (i32, i32, i32) {
    %c0_i32 = arith.constant 0 : i32
    %c0_i32_0 = arith.constant 0 : i32
    %c0_i32_1 = arith.constant 0 : i32
    return %arg0, %c0_i32, %c0_i32_0 : i32, i32, i32
  }
  func.func @transform_1(%arg0: i32) -> (i32, i32, i32) {
    %c0_i32 = arith.constant 0 : i32
    %c0_i32_0 = arith.constant 0 : i32
    %c0_i32_1 = arith.constant 0 : i32
    return %arg0, %c0_i32, %c0_i32_0 : i32, i32, i32
  }
  func.func @transform_2(%arg0: i32) -> (i32, i32) {
    %c0_i32 = arith.constant 0 : i32
    %c0_i32_0 = arith.constant 0 : i32
    %c0_i32_1 = arith.constant 0 : i32
    return %c0_i32, %c0_i32_0 : i32, i32
  }
  func.func @transform_3(%arg0: i32) -> (i32, i32) {
    %c0_i32 = arith.constant 0 : i32
    %c0_i32_0 = arith.constant 0 : i32
    %c0_i32_1 = arith.constant 0 : i32
    return %c0_i32, %c0_i32_0 : i32, i32
  }
  func.func @transform_4(%arg0: i32) -> (i32, i32) {
    %c0_i32 = arith.constant 0 : i32
    %c0_i32_0 = arith.constant 0 : i32
    %c0_i32_1 = arith.constant 0 : i32
    return %c0_i32, %c0_i32_0 : i32, i32
  }
  func.func @transform_5(%arg0: i32) -> (i32, i32) {
    %c0_i32 = arith.constant 0 : i32
    %c0_i32_0 = arith.constant 0 : i32
    %c0_i32_1 = arith.constant 0 : i32
    return %c0_i32, %c0_i32_0 : i32, i32
  }
  func.func @transform_6(%arg0: i32) -> i32 {
    %c0_i32 = arith.constant 0 : i32
    %c0_i32_0 = arith.constant 0 : i32
    return %c0_i32 : i32
  }
  func.func @transform_7(%arg0: i32) -> (i32, i32, i32) {
    %c0_i32 = arith.constant 0 : i32
    %c0_i32_0 = arith.constant 0 : i32
    %c0_i32_1 = arith.constant 0 : i32
    return %arg0, %c0_i32, %c0_i32_0 : i32, i32, i32
  }
  func.func @transform_8(%arg0: i32) -> (i32, i32, i32) {
    %c0_i32 = arith.constant 0 : i32
    %c0_i32_0 = arith.constant 0 : i32
    %c0_i32_1 = arith.constant 0 : i32
    return %arg0, %c0_i32, %c0_i32_0 : i32, i32, i32
  }
}

</mosaic_0001>

<llo_original>
// kernel: attention_forward.1
$region0: #{attention_forward.1}
  #allocation0 [shape = 'u32[]', space=smem, size = 0x4, offset = 0x4, fixed_abs, tag = 'smem constant byte address 0x4 - core index']
  #allocation1 [shape = 'u32[144,128]{1,0:T(1,128)}', space=vmem, size = 0x12000, scoped, tag = 'internal scratch']
  #allocation2 [shape = 'f32[1]{0:T(128)S(6)}', space=smem, size = 0x200, scoped, tag = 'scoped memory for attention_forward.1']
  %s0 = inlined_call_operand.vmem [shape: f32[2,16,32], index: 0, kind: input, shape index: {}]
  %s1 = inlined_call_operand.vmem [shape: f32[2,1,32], index: 1, kind: input, shape index: {}]
  %s2 = inlined_call_operand.vmem [shape: f32[32,32], index: 2, kind: input, shape index: {}]
  %s3 = inlined_call_operand.vmem [shape: f32[32,32], index: 3, kind: input, shape index: {}]
  %s4 = inlined_call_operand.vmem [shape: f32[1,32], index: 4, kind: input, shape index: {}]
  %s5 = inlined_call_operand.vmem [shape: f32[1,32], index: 5, kind: input, shape index: {}]
  %s6 = inlined_call_operand.<no memory space> [shape: f32[1], index: 6, kind: input, shape index: {}]
  %s7 = inlined_call_operand.hbm [shape: f32[2,1,32], index: 7, kind: output, shape index: {0}]
  %s8 = inlined_call_operand.hbm [shape: f32[2,1,16], index: 8, kind: output, shape index: {1}]
  %9 = xla_tuple %s7, %s8
  %s10 = sld [smem:[#allocation0]]
  $region46: #{attention_forward.1} parent=0
    _
  %s12 = ssub.s32 1, %s10
  %s13 = scalar_select 0, %s12, %s10
  %14 = sst [smem:[#allocation2]] %s6
  $region1: #{attention_forward.1} parent=0
    #allocation3 [shape = 'u8[1024]{0}', space=vmem, size = 0x400, scoped, tag = 'output window, operand 0, single buffered']
    #allocation4 [shape = 's32[1]{0}', space=sflag, size = 0x4, scoped, tag = 'scoped memory for attention_forward.1']
    #allocation5 [shape = 'u8[1024]{0}', space=vmem, size = 0x400, scoped, tag = 'output window, operand 1, single buffered']
    #allocation6 [shape = 's32[1]{0}', space=sflag, size = 0x4, scoped, tag = 'scoped memory for attention_forward.1']
    %15 = vsyncpa [#allocation4], 0
    %16 = vsyncpa [#allocation6], 0
    // Predicated region
    $region2: #{attention_forward.1} parent=1 // pred_check
      _
    $region3: #{attention_forward.1} parent=1 // pred_check_branch
      %18 = sbr.rel (0) target = $region5
    $region4: #{attention_forward.1} parent=1 // pred_region
      _
    $region5: #{attention_forward.1} parent=1 // pred_fallthru
      _
    // Predicated region
    $region6: #{attention_forward.1} parent=1 // pred_check
      _
    $region7: #{attention_forward.1} parent=1 // pred_check_branch
      %20 = sbr.rel (0) target = $region9
    $region8: #{attention_forward.1} parent=1 // pred_region
      _
    $region9: #{attention_forward.1} parent=1 // pred_fallthru
      _
    // Predicated region
    $region10: #{attention_forward.1} parent=1 // pred_check
      _
    $region11: #{attention_forward.1} parent=1 // pred_check_branch
      %22 = sbr.rel (0) target = $region13
    $region12: #{attention_forward.1} parent=1 // pred_region
      _
    $region13: #{attention_forward.1} parent=1 // pred_fallthru
      _
    // Predicated region
    $region14: #{attention_forward.1} parent=1 // pred_check
      _
    $region15: #{attention_forward.1} parent=1 // pred_check_branch
      %24 = sbr.rel (0) target = $region17
    $region16: #{attention_forward.1} parent=1 // pred_region
      _
    $region17: #{attention_forward.1} parent=1 // pred_fallthru
      _
    // Predicated region
    $region18: #{attention_forward.1} parent=1 // pred_check
      _
    $region19: #{attention_forward.1} parent=1 // pred_check_branch
      %26 = sbr.rel (0) target = $region21
    $region20: #{attention_forward.1} parent=1 // pred_region
      _
    $region21: #{attention_forward.1} parent=1 // pred_fallthru
      _
    // Predicated region
    $region22: #{attention_forward.1} parent=1 // pred_check
      _
    $region23: #{attention_forward.1} parent=1 // pred_check_branch
      %28 = sbr.rel (0) target = $region25
    $region24: #{attention_forward.1} parent=1 // pred_region
      _
    $region25: #{attention_forward.1} parent=1 // pred_fallthru
      _
    // Predicated region
    $region26: #{attention_forward.1} parent=1 // pred_check
      _
    $region27: #{attention_forward.1} parent=1 // pred_check_branch
      %30 = sbr.rel (0) target = $region29
    $region28: #{attention_forward.1} parent=1 // pred_region
      _
    $region29: #{attention_forward.1} parent=1 // pred_fallthru
      _
    %v31 = vld [vmem:[%s0] sm:$0xff]
    %v32 = vld [vmem:[%s0 + $0x8] sm:$0xff]
    %v33 = vld [vmem:[%s0 + $0x10] sm:$0xff]
    %v34 = vld [vmem:[%s0 + $0x18] sm:$0xff]
    %v35 = vld [vmem:[%s2] sm:$0xff]
    %v36 = vld [vmem:[%s2 + $0x8] sm:$0xff]
    %v37 = vld [vmem:[%s2 + $0x10] sm:$0xff]
    %v38 = vld [vmem:[%s2 + $0x18] sm:$0xff]
    %vm39 = vcmask 261120
    %v41 = vsel %vm39, %v31, 0
    %v44 = vsel %vm39, %v32, 0
    %v47 = vsel %vm39, %v33, 0
    %v50 = vsel %vm39, %v34, 0
    %52 = vmatprep.subr.mxu0 0.0
    %53 = vmatpush1.msra.mxu0 %v35
    %54 = vmatprep.subr.mxu0 0.0
    %55 = vmatpush1.msra.mxu0 %v36
    %56 = vmatprep.subr.mxu0 0.0
    %57 = vmatpush1.msra.mxu0 %v37
    %58 = vmatprep.subr.mxu0 0.0
    %59 = vmatpush1.msra.mxu0 %v38
    %60 = vmatprep.subr.mxu0 0.0
    %61 = vmatpush1.msra.mxu0 0.0
    %62 = vmatprep.subr.mxu0 0.0
    %63 = vmatpush1.msra.mxu0 0.0
    %64 = vmatprep.subr.mxu0 0.0
    %65 = vmatpush1.msra.mxu0 0.0
    %66 = vmatprep.subr.mxu0 0.0
    %67 = vmatpush1.msra.mxu0 0.0
    %68 = vmatprep.subr.mxu0 0.0
    %69 = vmatpush1.msra.mxu0 0.0
    %70 = vmatprep.subr.mxu0 0.0
    %71 = vmatpush1.msra.mxu0 0.0
    %72 = vmatprep.subr.mxu0 0.0
    %73 = vmatpush1.msra.mxu0 0.0
    %74 = vmatprep.subr.mxu0 0.0
    %75 = vmatpush1.msra.mxu0 0.0
    %76 = vmatprep.subr.mxu0 0.0
    %77 = vmatpush1.msra.mxu0 0.0
    %78 = vmatprep.subr.mxu0 0.0
    %79 = vmatpush1.msra.mxu0 0.0
    %80 = vmatprep.subr.mxu0 0.0
    %81 = vmatpush1.msra.mxu0 0.0
    %82 = vmatprep.subr.mxu0 0.0
    %83 = vmatpush1.msra.mxu0 0.0
    %84 = vmatprep.subr.mxu0 0.0
    %85 = vmatpush1.msra.mxu0 0.0
    %86 = vmatprep.subr.mxu0 0.0
    %87 = vmatpush1.msra.mxu0 0.0
    %88 = vmatprep.subr.mxu0 0.0
    %89 = vmatpush1.msra.mxu0 0.0
    %90 = vmatprep.subr.mxu0 0.0
    %91 = vmatpush1.msra.mxu0 0.0
    %92 = vmatprep.subr.mxu0 0.0
    %93 = vmatpush1.msra.mxu0 0.0
    %94 = vmatprep.subr.mxu0 0.0
    %95 = vmatpush1.msra.mxu0 0.0
    %96 = vmatprep.subr.mxu0 0.0
    %97 = vmatpush1.msra.mxu0 0.0
    %98 = vmatprep.subr.mxu0 0.0
    %99 = vmatpush1.msra.mxu0 0.0
    %100 = vmatprep.subr.mxu0 0.0
    %101 = vmatpush1.msra.mxu0 0.0
    %102 = vmatprep.subr.mxu0 0.0
    %103 = vmatpush1.msra.mxu0 0.0
    %104 = vmatprep.subr.mxu0 0.0
    %105 = vmatpush1.msra.mxu0 0.0
    %106 = vmatprep.subr.mxu0 0.0
    %107 = vmatpush1.msra.mxu0 0.0
    %108 = vmatprep.subr.mxu0 0.0
    %109 = vmatpush1.msra.mxu0 0.0
    %110 = vmatprep.subr.mxu0 0.0
    %111 = vmatpush1.msra.mxu0 0.0
    %112 = vmatprep.subr.mxu0 0.0
    %113 = vmatpush1.msra.mxu0 0.0
    %114 = vmatprep.subr.mxu0 0.0
    %115 = vmatpush1.msra.mxu0 0.0
    %116 = vmatprep.mubr.f32.mxu0 0.0
    %117 = vmatmul.mubr.f32.gmra.mrb[0].mxu0 %v41
    %v118 = vpop.f32.mrb[0].mxu0
    %v119 = vadd.f32 0.0, %v118
    %v120 = vpop.f32.mrb[0].mxu0
    %121 = vmatprep.mubr.f32.mxu0 0.0
    %122 = vmatmul.mubr.f32.gmra.mrb[0].mxu0 %v44
    %v123 = vpop.f32.mrb[0].mxu0
    %v124 = vadd.f32 0.0, %v123
    %v125 = vpop.f32.mrb[0].mxu0
    %126 = vmatprep.mubr.f32.mxu0 0.0
    %127 = vmatmul.mubr.f32.gmra.mrb[0].mxu0 %v47
    %v128 = vpop.f32.mrb[0].mxu0
    %v129 = vadd.f32 0.0, %v128
    %v130 = vpop.f32.mrb[0].mxu0
    %131 = vmatprep.mubr.f32.mxu0 0.0
    %132 = vmatmul.mubr.f32.gmra.mrb[0].mxu0 %v50
    %v133 = vpop.f32.mrb[0].mxu0
    %v134 = vadd.f32 0.0, %v133
    %v135 = vpop.f32.mrb[0].mxu0
    %136 = vdwg.mxu0
    %v137 = vld [vmem:[%s1] sm:$0x1]
    %v138 = vld [vmem:[%s1 + $0x1] sm:$0x1]
    %v139 = vld [vmem:[%s3] sm:$0xff]
    %v140 = vld [vmem:[%s3 + $0x8] sm:$0xff]
    %v141 = vld [vmem:[%s3 + $0x10] sm:$0xff]
    %v142 = vld [vmem:[%s3 + $0x18] sm:$0xff]
    %v145 = vcombine.low %v137, %v138
    %v147 = vunpack.c.l.s4 1966171168
    %v148 = vunpack.c.0.s8 %v147
    %v149 = vlaneseq
    %v150 = vshrl.u32 %v149, 7
    %v151 = vsub.s32 %v148, %v150
    %v152 = vrot.slane %v145, %v151
    %v154 = vunpack.c.l.s4 1966171168
    %v155 = vunpack.c.0.s8 %v154
    %v156 = vlaneseq
    %v157 = vshrl.u32 %v156, 7
    %v158 = vsub.s32 %v155, %v157
    %v159 = vrot.slane %v152, %v158
    %v160 = vsel %vm39, %v159, 0
    %162 = vmatprep.subr.mxu0 0.0
    %163 = vmatpush1.msra.mxu0 %v139
    %164 = vmatprep.subr.mxu0 0.0
    %165 = vmatpush1.msra.mxu0 %v140
    %166 = vmatprep.subr.mxu0 0.0
    %167 = vmatpush1.msra.mxu0 %v141
    %168 = vmatprep.subr.mxu0 0.0
    %169 = vmatpush1.msra.mxu0 %v142
    %170 = vmatprep.subr.mxu0 0.0
    %171 = vmatpush1.msra.mxu0 0.0
    %172 = vmatprep.subr.mxu0 0.0
    %173 = vmatpush1.msra.mxu0 0.0
    %174 = vmatprep.subr.mxu0 0.0
    %175 = vmatpush1.msra.mxu0 0.0
    %176 = vmatprep.subr.mxu0 0.0
    %177 = vmatpush1.msra.mxu0 0.0
    %178 = vmatprep.subr.mxu0 0.0
    %179 = vmatpush1.msra.mxu0 0.0
    %180 = vmatprep.subr.mxu0 0.0
    %181 = vmatpush1.msra.mxu0 0.0
    %182 = vmatprep.subr.mxu0 0.0
    %183 = vmatpush1.msra.mxu0 0.0
    %184 = vmatprep.subr.mxu0 0.0
    %185 = vmatpush1.msra.mxu0 0.0
    %186 = vmatprep.subr.mxu0 0.0
    %187 = vmatpush1.msra.mxu0 0.0
    %188 = vmatprep.subr.mxu0 0.0
    %189 = vmatpush1.msra.mxu0 0.0
    %190 = vmatprep.subr.mxu0 0.0
    %191 = vmatpush1.msra.mxu0 0.0
    %192 = vmatprep.subr.mxu0 0.0
    %193 = vmatpush1.msra.mxu0 0.0
    %194 = vmatprep.subr.mxu0 0.0
    %195 = vmatpush1.msra.mxu0 0.0
    %196 = vmatprep.subr.mxu0 0.0
    %197 = vmatpush1.msra.mxu0 0.0
    %198 = vmatprep.subr.mxu0 0.0
    %199 = vmatpush1.msra.mxu0 0.0
    %200 = vmatprep.subr.mxu0 0.0
    %201 = vmatpush1.msra.mxu0 0.0
    %202 = vmatprep.subr.mxu0 0.0
    %203 = vmatpush1.msra.mxu0 0.0
    %204 = vmatprep.subr.mxu0 0.0
    %205 = vmatpush1.msra.mxu0 0.0
    %206 = vmatprep.subr.mxu0 0.0
    %207 = vmatpush1.msra.mxu0 0.0
    %208 = vmatprep.subr.mxu0 0.0
    %209 = vmatpush1.msra.mxu0 0.0
    %210 = vmatprep.subr.mxu0 0.0
    %211 = vmatpush1.msra.mxu0 0.0
    %212 = vmatprep.subr.mxu0 0.0
    %213 = vmatpush1.msra.mxu0 0.0
    %214 = vmatprep.subr.mxu0 0.0
    %215 = vmatpush1.msra.mxu0 0.0
    %216 = vmatprep.subr.mxu0 0.0
    %217 = vmatpush1.msra.mxu0 0.0
    %218 = vmatprep.subr.mxu0 0.0
    %219 = vmatpush1.msra.mxu0 0.0
    %220 = vmatprep.subr.mxu0 0.0
    %221 = vmatpush1.msra.mxu0 0.0
    %222 = vmatprep.subr.mxu0 0.0
    %223 = vmatpush1.msra.mxu0 0.0
    %224 = vmatprep.subr.mxu0 0.0
    %225 = vmatpush1.msra.mxu0 0.0
    %226 = vmatprep.mubr.f32.mxu0 0.0
    %227 = vmatmul.mubr.f32.gmra.mrb[0].mxu0 %v160
    %v228 = vpop.f32.mrb[0].mxu0
    %v229 = vadd.f32 0.0, %v228
    %v230 = vpop.f32.mrb[0].mxu0
    %231 = vdwg.mxu0
    %v234 = vunpack.c.l.s4 1966171168
    %v235 = vunpack.c.0.s8 %v234
    %v236 = vlaneseq
    %v237 = vshrl.u32 %v236, 7
    %v238 = vsub.s32 %v235, %v237
    %v239 = vrot.slane %v229, %v238
    %v240 = vcombine.high %v239, %v239
    %v242 = vunpack.c.l.s4 1966171168
    %v243 = vunpack.c.0.s8 %v242
    %v244 = vlaneseq
    %v245 = vshrl.u32 %v244, 7
    %v246 = vsub.s32 %v243, %v245
    %v247 = vrot.slane %v239, %v246
    %v249 = vunpack.c.l.s4 1966171168
    %v250 = vunpack.c.0.s8 %v249
    %v251 = vlaneseq
    %v252 = vshrl.u32 %v251, 7
    %v253 = vsub.s32 %v250, %v252
    %v254 = vrot.slane %v240, %v253
    %v255 = vlaneseq
    %v256 = vshrl.u32 %v255, 7
    %v257 = vsub.s32 0, %v256
    %v258 = vrot.slane %v247, %v257
    %v259 = vlaneseq
    %v260 = vshrl.u32 %v259, 7
    %v261 = vsub.s32 0, %v260
    %v262 = vrot.slane %v254, %v261
    %v265 = vadd.f32 %v119, %v258
    %v266 = vadd.f32 %v124, %v258
    %v267 = vadd.f32 %v129, %v262
    %v268 = vadd.f32 %v134, %v262
    %v269 = vld [vmem:[%s5] sm:$0x1]
    %v271 = vlaneseq
    %v272 = vshrl.u32 %v271, 7
    %v273 = vsub.s32 0, %v272
    %v274 = vrot.slane %v269, %v273
    %v276 = vadd.f32 %v265, %v274
    %v277 = vadd.f32 %v266, %v274
    %v278 = vadd.f32 %v267, %v274
    %v279 = vadd.f32 %v268, %v274
    %v280 = vmax.f32 %v276, 0.0
    %v281 = vmax.f32 %v277, 0.0
    %v282 = vmax.f32 %v278, 0.0
    %v283 = vmax.f32 %v279, 0.0
    %v284 = vld [vmem:[%s4] sm:$0x1]
    %v286 = vlaneseq
    %v287 = vshrl.u32 %v286, 7
    %v288 = vsub.s32 0, %v287
    %v289 = vrot.slane %v284, %v288
    %v291 = vmul.f32 %v280, %v289
    %v292 = vmul.f32 %v281, %v289
    %v293 = vmul.f32 %v282, %v289
    %v294 = vmul.f32 %v283, %v289
    %v295 = vsel %vm39, %v291, 0.0
    %296 = vadd.xlane.f32.xlu0 %v295
    %v297 = vpop.xlane.xlu0 %296
    %v298 = vsel %vm39, %v292, 0.0
    %299 = vadd.xlane.f32.xlu0 %v298
    %v300 = vpop.xlane.xlu0 %299
    %v301 = vsel %vm39, %v293, 0.0
    %302 = vadd.xlane.f32.xlu0 %v301
    %v303 = vpop.xlane.xlu0 %302
    %v304 = vsel %vm39, %v294, 0.0
    %305 = vadd.xlane.f32.xlu0 %v304
    %v306 = vpop.xlane.xlu0 %305
    %s307 = sld [smem:[#allocation2]]
    %v308 = vstv %s307
    %v309 = vadd.f32 %v297, %v308
    %v310 = vadd.f32 %v300, %v308
    %v311 = vadd.f32 %v303, %v308
    %v312 = vadd.f32 %v306, %v308
    %v317 = vlaneseq
    %v318 = vand.u32 %v317, 127
    %v319 = vlaneseq
    %v320 = vshrl.u32 %v319, 7
    %v321 = vsub.s32 %v318, %v320
    %v322 = vrot.slane %v309, %v321
    %v323 = vadd.s32 %v318, 4294967288
    %v324 = vlaneseq
    %v325 = vshrl.u32 %v324, 7
    %v326 = vsub.s32 %v323, %v325
    %v327 = vrot.slane %v310, %v326
    %vm328 = vcmask 130112
    %v329 = vsel %vm328, %v327, %v322
    %v330 = vlaneseq
    %v331 = vshrl.u32 %v330, 7
    %v332 = vsub.s32 %v318, %v331
    %v333 = vrot.slane %v311, %v332
    %v334 = vlaneseq
    %v335 = vshrl.u32 %v334, 7
    %v336 = vsub.s32 %v323, %v335
    %v337 = vrot.slane %v312, %v336
    %v338 = vsel %vm328, %v337, %v333
    %vm339 = vcmask 1041409
    %v340 = vsel %vm339, %v338, %v329
    %vm342 = vcmask 123904
    %v343 = vsel %vm342, %v340, -inf
    %344 = vmax.xlane.f32.xlu0 %v343
    %v345 = vpop.xlane.xlu0 %344
    %v347 = vlaneseq
    %v348 = vshrl.u32 %v347, 7
    %v349 = vsub.s32 0, %v348
    %v350 = vrot.slane %v345, %v349
    %v351 = vlaneseq
    %v352 = vshrl.u32 %v351, 7
    %v353 = vsub.s32 1, %v352
    %v354 = vrot.slane %v345, %v353
    %v357 = vsub.f32 %v309, %v350
    %v358 = vsub.f32 %v310, %v350
    %v359 = vsub.f32 %v311, %v354
    %v360 = vsub.f32 %v312, %v354
    %v361 = vmul.f32 %v357, 1.442695
    %v362 = vpow.pop %v361
    %v363 = vmul.f32 %v358, 1.442695
    %v364 = vpow.pop %v363
    %v365 = vmul.f32 %v359, 1.442695
    %v366 = vpow.pop %v365
    %v367 = vmul.f32 %v360, 1.442695
    %v368 = vpow.pop %v367
    %373 = vset.pattern.permute.xlu0 0
    %374 = vperm.xlu0 %373, %v362
    %v375 = vpop.permute.xlu0 %374
    %376 = vset.pattern.permute.xlu0 0
    %377 = vperm.xlu0 %376, %v364
    %v378 = vpop.permute.xlu0 %377
    %379 = vset.pattern.permute.xlu0 0
    %380 = vperm.xlu0 %379, %v366
    %v381 = vpop.permute.xlu0 %380
    %382 = vset.pattern.permute.xlu0 0
    %383 = vperm.xlu0 %382, %v368
    %v384 = vpop.permute.xlu0 %383
    %v385 = vlaneseq
    %v386 = vshrl.u32 %v385, 7
    %v387 = vsub.s32 %v318, %v386
    %v388 = vrot.slane %v375, %v387
    %v389 = vlaneseq
    %v390 = vshrl.u32 %v389, 7
    %v391 = vsub.s32 %v323, %v390
    %v392 = vrot.slane %v378, %v391
    %v393 = vsel %vm328, %v392, %v388
    %v394 = vlaneseq
    %v395 = vshrl.u32 %v394, 7
    %v396 = vsub.s32 %v318, %v395
    %v397 = vrot.slane %v381, %v396
    %v398 = vlaneseq
    %v399 = vshrl.u32 %v398, 7
    %v400 = vsub.s32 %v323, %v399
    %v401 = vrot.slane %v384, %v400
    %v402 = vsel %vm328, %v401, %v397
    %v403 = vsel %vm339, %v402, %v393
    %v405 = vsel %vm342, %v403, 0.0
    %406 = vadd.xlane.f32.xlu0 %v405
    %v407 = vpop.xlane.xlu0 %406
    %v409 = vlaneseq
    %v410 = vshrl.u32 %v409, 7
    %v411 = vsub.s32 0, %v410
    %v412 = vrot.slane %v407, %v411
    %v413 = vlaneseq
    %v414 = vshrl.u32 %v413, 7
    %v415 = vsub.s32 1, %v414
    %v416 = vrot.slane %v407, %v415
    %v419 = vrcp.pop %v412
    %v420 = vmul.f32 %v362, %v419
    %v421 = vmul.f32 %v364, %v419
    %v422 = vrcp.pop %v416
    %v423 = vmul.f32 %v366, %v422
    %v424 = vmul.f32 %v368, %v422
    %427 = vset.pattern.permute.xlu0 0
    %428 = vperm.xlu0 %427, %v420
    %v429 = vpop.permute.xlu0 %428
    %430 = vset.pattern.permute.xlu0 0
    %431 = vperm.xlu0 %430, %v421
    %v432 = vpop.permute.xlu0 %431
    %v433 = vlaneseq
    %v434 = vshrl.u32 %v433, 7
    %v435 = vsub.s32 %v318, %v434
    %v436 = vrot.slane %v429, %v435
    %v437 = vlaneseq
    %v438 = vshrl.u32 %v437, 7
    %v439 = vsub.s32 %v323, %v438
    %v440 = vrot.slane %v432, %v439
    %v441 = vsel %vm328, %v440, %v436
    %vm442 = vcmask 130048
    %v443 = vsel %vm442, %v441, 0
    %445 = vmatprep.subr.mxu0 0.0
    %446 = vmatpush1.msra.mxu0 %v31
    %447 = vmatprep.subr.mxu0 0.0
    %448 = vmatpush1.msra.mxu0 %v32
    %449 = vmatprep.subr.mxu0 0.0
    %450 = vmatpush1.msra.mxu0 0.0
    %451 = vmatprep.subr.mxu0 0.0
    %452 = vmatpush1.msra.mxu0 0.0
    %453 = vmatprep.subr.mxu0 0.0
    %454 = vmatpush1.msra.mxu0 0.0
    %455 = vmatprep.subr.mxu0 0.0
    %456 = vmatpush1.msra.mxu0 0.0
    %457 = vmatprep.subr.mxu0 0.0
    %458 = vmatpush1.msra.mxu0 0.0
    %459 = vmatprep.subr.mxu0 0.0
    %460 = vmatpush1.msra.mxu0 0.0
    %461 = vmatprep.subr.mxu0 0.0
    %462 = vmatpush1.msra.mxu0 0.0
    %463 = vmatprep.subr.mxu0 0.0
    %464 = vmatpush1.msra.mxu0 0.0
    %465 = vmatprep.subr.mxu0 0.0
    %466 = vmatpush1.msra.mxu0 0.0
    %467 = vmatprep.subr.mxu0 0.0
    %468 = vmatpush1.msra.mxu0 0.0
    %469 = vmatprep.subr.mxu0 0.0
    %470 = vmatpush1.msra.mxu0 0.0
    %471 = vmatprep.subr.mxu0 0.0
    %472 = vmatpush1.msra.mxu0 0.0
    %473 = vmatprep.subr.mxu0 0.0
    %474 = vmatpush1.msra.mxu0 0.0
    %475 = vmatprep.subr.mxu0 0.0
    %476 = vmatpush1.msra.mxu0 0.0
    %477 = vmatprep.subr.mxu0 0.0
    %478 = vmatpush1.msra.mxu0 0.0
    %479 = vmatprep.subr.mxu0 0.0
    %480 = vmatpush1.msra.mxu0 0.0
    %481 = vmatprep.subr.mxu0 0.0
    %482 = vmatpush1.msra.mxu0 0.0
    %483 = vmatprep.subr.mxu0 0.0
    %484 = vmatpush1.msra.mxu0 0.0
    %485 = vmatprep.subr.mxu0 0.0
    %486 = vmatpush1.msra.mxu0 0.0
    %487 = vmatprep.subr.mxu0 0.0
    %488 = vmatpush1.msra.mxu0 0.0
    %489 = vmatprep.subr.mxu0 0.0
    %490 = vmatpush1.msra.mxu0 0.0
    %491 = vmatprep.subr.mxu0 0.0
    %492 = vmatpush1.msra.mxu0 0.0
    %493 = vmatprep.subr.mxu0 0.0
    %494 = vmatpush1.msra.mxu0 0.0
    %495 = vmatprep.subr.mxu0 0.0
    %496 = vmatpush1.msra.mxu0 0.0
    %497 = vmatprep.subr.mxu0 0.0
    %498 = vmatpush1.msra.mxu0 0.0
    %499 = vmatprep.subr.mxu0 0.0
    %500 = vmatpush1.msra.mxu0 0.0
    %501 = vmatprep.subr.mxu0 0.0
    %502 = vmatpush1.msra.mxu0 0.0
    %503 = vmatprep.subr.mxu0 0.0
    %504 = vmatpush1.msra.mxu0 0.0
    %505 = vmatprep.subr.mxu0 0.0
    %506 = vmatpush1.msra.mxu0 0.0
    %507 = vmatprep.subr.mxu0 0.0
    %508 = vmatpush1.msra.mxu0 0.0
    %509 = vmatprep.mubr.f32.mxu0 0.0
    %510 = vmatmul.mubr.f32.gmra.mrb[0].mxu0 %v443
    %v511 = vpop.f32.mrb[0].mxu0
    %v512 = vadd.f32 0.0, %v511
    %v513 = vpop.f32.mrb[0].mxu0
    %514 = vdwg.mxu0
    %517 = vset.pattern.permute.xlu0 0
    %518 = vperm.xlu0 %517, %v423
    %v519 = vpop.permute.xlu0 %518
    %520 = vset.pattern.permute.xlu0 0
    %521 = vperm.xlu0 %520, %v424
    %v522 = vpop.permute.xlu0 %521
    %v523 = vlaneseq
    %v524 = vshrl.u32 %v523, 7
    %v525 = vsub.s32 %v318, %v524
    %v526 = vrot.slane %v519, %v525
    %v527 = vlaneseq
    %v528 = vshrl.u32 %v527, 7
    %v529 = vsub.s32 %v323, %v528
    %v530 = vrot.slane %v522, %v529
    %v531 = vsel %vm328, %v530, %v526
    %v532 = vsel %vm442, %v531, 0
    %534 = vmatprep.subr.mxu0 0.0
    %535 = vmatpush1.msra.mxu0 %v33
    %536 = vmatprep.subr.mxu0 0.0
    %537 = vmatpush1.msra.mxu0 %v34
    %538 = vmatprep.subr.mxu0 0.0
    %539 = vmatpush1.msra.mxu0 0.0
    %540 = vmatprep.subr.mxu0 0.0
    %541 = vmatpush1.msra.mxu0 0.0
    %542 = vmatprep.subr.mxu0 0.0
    %543 = vmatpush1.msra.mxu0 0.0
    %544 = vmatprep.subr.mxu0 0.0
    %545 = vmatpush1.msra.mxu0 0.0
    %546 = vmatprep.subr.mxu0 0.0
    %547 = vmatpush1.msra.mxu0 0.0
    %548 = vmatprep.subr.mxu0 0.0
    %549 = vmatpush1.msra.mxu0 0.0
    %550 = vmatprep.subr.mxu0 0.0
    %551 = vmatpush1.msra.mxu0 0.0
    %552 = vmatprep.subr.mxu0 0.0
    %553 = vmatpush1.msra.mxu0 0.0
    %554 = vmatprep.subr.mxu0 0.0
    %555 = vmatpush1.msra.mxu0 0.0
    %556 = vmatprep.subr.mxu0 0.0
    %557 = vmatpush1.msra.mxu0 0.0
    %558 = vmatprep.subr.mxu0 0.0
    %559 = vmatpush1.msra.mxu0 0.0
    %560 = vmatprep.subr.mxu0 0.0
    %561 = vmatpush1.msra.mxu0 0.0
    %562 = vmatprep.subr.mxu0 0.0
    %563 = vmatpush1.msra.mxu0 0.0
    %564 = vmatprep.subr.mxu0 0.0
    %565 = vmatpush1.msra.mxu0 0.0
    %566 = vmatprep.subr.mxu0 0.0
    %567 = vmatpush1.msra.mxu0 0.0
    %568 = vmatprep.subr.mxu0 0.0
    %569 = vmatpush1.msra.mxu0 0.0
    %570 = vmatprep.subr.mxu0 0.0
    %571 = vmatpush1.msra.mxu0 0.0
    %572 = vmatprep.subr.mxu0 0.0
    %573 = vmatpush1.msra.mxu0 0.0
    %574 = vmatprep.subr.mxu0 0.0
    %575 = vmatpush1.msra.mxu0 0.0
    %576 = vmatprep.subr.mxu0 0.0
    %577 = vmatpush1.msra.mxu0 0.0
    %578 = vmatprep.subr.mxu0 0.0
    %579 = vmatpush1.msra.mxu0 0.0
    %580 = vmatprep.subr.mxu0 0.0
    %581 = vmatpush1.msra.mxu0 0.0
    %582 = vmatprep.subr.mxu0 0.0
    %583 = vmatpush1.msra.mxu0 0.0
    %584 = vmatprep.subr.mxu0 0.0
    %585 = vmatpush1.msra.mxu0 0.0
    %586 = vmatprep.subr.mxu0 0.0
    %587 = vmatpush1.msra.mxu0 0.0
    %588 = vmatprep.subr.mxu0 0.0
    %589 = vmatpush1.msra.mxu0 0.0
    %590 = vmatprep.subr.mxu0 0.0
    %591 = vmatpush1.msra.mxu0 0.0
    %592 = vmatprep.subr.mxu0 0.0
    %593 = vmatpush1.msra.mxu0 0.0
    %594 = vmatprep.subr.mxu0 0.0
    %595 = vmatpush1.msra.mxu0 0.0
    %596 = vmatprep.subr.mxu0 0.0
    %597 = vmatpush1.msra.mxu0 0.0
    %598 = vmatprep.mubr.f32.mxu0 0.0
    %599 = vmatmul.mubr.f32.gmra.mrb[0].mxu0 %v532
    %v600 = vpop.f32.mrb[0].mxu0
    %v601 = vadd.f32 0.0, %v600
    %v602 = vpop.f32.mrb[0].mxu0
    %603 = vdwg.mxu0
    %vm604 = vcmask 253952
    %605 = vst.msk [vmem:[#allocation3] sm:$0x1] %vm604, %v512
    %606 = vst.msk [vmem:[#allocation3 + $0x1] sm:$0x1] %vm604, %v601
    %vm609 = vcmask 122880
    %610 = vst.msk [vmem:[#allocation5] sm:$0x1] %vm609, %v441
    %611 = vst.msk [vmem:[#allocation5 + $0x1] sm:$0x1] %vm609, %v531
    // Predicated region
    $region30: #{attention_forward.1} parent=1 // pred_check
      _
    $region31: #{attention_forward.1} parent=1 // pred_check_branch
      %613 = sbr.rel (0) target = $region33
    $region32: #{attention_forward.1} parent=1 // pred_region
      %s615 = ssub.s32 32, 32
      %616 = vsyncadd [#allocation4], %s615
      %s617 = sshll.u32 [#allocation3], 4
      %s618 = int_to_ptr.vmem [resolvable:$true] %s617
      %623 = dma.vmem_to_hbm [thread:$0]  %s618, 32, %s7, [#allocation4], 16, 16, 1
    $region33: #{attention_forward.1} parent=1 // pred_fallthru
      _
    // Predicated region
    $region34: #{attention_forward.1} parent=1 // pred_check
      _
    $region35: #{attention_forward.1} parent=1 // pred_check_branch
      %625 = sbr.rel (0) target = $region37
    $region36: #{attention_forward.1} parent=1 // pred_region
      %s627 = ssub.s32 32, 32
      %628 = vsyncadd [#allocation6], %s627
      %s629 = sshll.u32 [#allocation5], 4
      %s630 = int_to_ptr.vmem [resolvable:$true] %s629
      %635 = dma.vmem_to_hbm [thread:$0]  %s630, 32, %s8, [#allocation6], 16, 16, 1
    $region37: #{attention_forward.1} parent=1 // pred_fallthru
      _
    // Predicated region
    $region38: #{attention_forward.1} parent=1 // pred_check
      _
    $region39: #{attention_forward.1} parent=1 // pred_check_branch
      %637 = sbr.rel (0) target = $region41
    $region40: #{attention_forward.1} parent=1 // pred_region
      %638 = dma.done [#allocation4], 32
    $region41: #{attention_forward.1} parent=1 // pred_fallthru
      _
    // Predicated region
    $region42: #{attention_forward.1} parent=1 // pred_check
      _
    $region43: #{attention_forward.1} parent=1 // pred_check_branch
      %640 = sbr.rel (0) target = $region45
    $region44: #{attention_forward.1} parent=1 // pred_region
      %641 = dma.done [#allocation6], 32
    $region45: #{attention_forward.1} parent=1 // pred_fallthru
      _
    %642 = vsyncpa [#allocation4], 1
    %643 = vsyncpa [#allocation6], 1

</llo_original>
